<compile_context>
chip_gen: v5e
topology: v5e:2x2
jax: 0.10.0
libtpu: 0.0.40
codegen_flags: <defaults>
</compile_context>

<pallas_src>
import jax
import jax.numpy as jnp
from jax import lax
from jax.experimental import pallas as pl
from jax.experimental.pallas import tpu as pltpu


def _make_addnorm_kernel(*, eps, inv_h, use_seg, use_mask):
    """Build the fused add + (optional dropout-mask) + LayerNorm kernel body.

    Ref order: x, y, [mask], gamma, beta, [seg], out.
    """

    def kernel(*refs):
        o_ref = refs[-1]
        it = iter(refs[:-1])
        x_ref = next(it)
        y = next(it)[...].astype(jnp.float32)
        if use_mask:
            y = y * next(it)[...]                     # pre-scaled inverted-dropout mask
        z = x_ref[...].astype(jnp.float32) + y        # residual add
        gamma = next(it)[...].astype(jnp.float32)
        beta = next(it)[...].astype(jnp.float32)

        if use_seg:
            # Lane-dense path: the 128-wide lane dim holds `group` logical rows of
            # width `hidden`.  seg is (W, W) block-diagonal ones, so z @ seg gives
            # each lane the sum of its own hidden-segment (broadcast-ready), on MXU.
            seg = next(it)[...]
            mean = jnp.dot(z, seg, precision=jax.lax.Precision.HIGHEST,
                           preferred_element_type=jnp.float32) * inv_h
            c = z - mean
            var = jnp.dot(c * c, seg, precision=jax.lax.Precision.HIGHEST,
                          preferred_element_type=jnp.float32) * inv_h
        else:
            mean = jnp.mean(z, axis=-1, keepdims=True)
            c = z - mean
            var = jnp.mean(c * c, axis=-1, keepdims=True)

        o_ref[...] = (c * lax.rsqrt(var + eps) * gamma + beta).astype(o_ref.dtype)

    return kernel


def add_norm(x, y, gamma, beta, *, dropout_rate=0.0, training=False, eps=1e-5,
             dropout_key=None, tile_rows=2048):
    """AddNorm: LayerNorm(dropout(Y) + X) over the last axis."""
    assert x.shape == y.shape
    orig_shape = x.shape
    hidden = orig_shape[-1]
    rows = x.size // hidden
    out_dtype = x.dtype

    # ---- lane-dense packing: fold `group` rows into one 128-wide lane row ----
    if hidden < 128 and 128 % hidden == 0 and rows % (128 // hidden) == 0:
        group = 128 // hidden
    else:
        group = 1
    use_seg = group > 1
    W = group * hidden
    prows = rows // group

    # ---- big row tiles; multiple of 8 unless one block covers everything ----
    if prows <= tile_rows:
        tile = prows
        padded = prows
    else:
        tile = max(8, (min(tile_rows, prows) // 8) * 8)
        padded = int(pl.cdiv(prows, tile)) * tile
    n_tiles = padded // tile

    x2 = x.reshape(prows, W)
    y2 = y.reshape(prows, W)
    if padded != prows:
        pad = ((0, padded - prows), (0, 0))
        x2 = jnp.pad(x2, pad)
        y2 = jnp.pad(y2, pad)

    gamma_t = jnp.tile(gamma.reshape(-1).astype(jnp.float32), group).reshape(1, W)
    beta_t = jnp.tile(beta.reshape(-1).astype(jnp.float32), group).reshape(1, W)

    use_mask = bool(training) and float(dropout_rate) > 0.0

    row_spec = pl.BlockSpec((tile, W), lambda i: (i, 0))
    const_spec = pl.BlockSpec((1, W), lambda i: (0, 0))

    operands = [x2, y2]
    in_specs = [row_spec, row_spec]

    if use_mask:
        # TODO(synk): mask comes from jax.random (distributionally equivalent to
        # torch.nn.Dropout, but not the same RNG stream / bit pattern).
        if dropout_key is None:
            dropout_key = jax.random.PRNGKey(0)
        keep = jax.random.bernoulli(dropout_key, 1.0 - float(dropout_rate), (padded, W))
        mask = keep.astype(jnp.float32) * (1.0 / (1.0 - float(dropout_rate)))
        operands.append(mask)
        in_specs.append(row_spec)

    operands += [gamma_t, beta_t]
    in_specs += [const_spec, const_spec]

    if use_seg:
        lane = lax.broadcasted_iota(jnp.int32, (W, W), 0)
        col = lax.broadcasted_iota(jnp.int32, (W, W), 1)
        seg = (lane // hidden == col // hidden).astype(jnp.float32)
        operands.append(seg)
        in_specs.append(pl.BlockSpec((W, W), lambda i: (0, 0)))

    kernel = _make_addnorm_kernel(eps=float(eps), inv_h=1.0 / float(hidden),
                                  use_seg=use_seg, use_mask=use_mask)

    out = pl.pallas_call(
        kernel,
        out_shape=jax.ShapeDtypeStruct((padded, W), out_dtype),
        grid=(n_tiles,),
        in_specs=in_specs,
        out_specs=row_spec,
        compiler_params=pltpu.CompilerParams(
            dimension_semantics=("parallel",),      # rows independent; shards on v7x
            vmem_limit_bytes=48 * 1024 * 1024,      # fits v5e/v6e/v7x with 2x buffering
        ),
    )(*operands)

    if padded != prows:
        out = out[:prows]
    return out.reshape(orig_shape)


def _reference_eval(x, y, gamma, beta, eps=1e-5):
    z = (x + y).astype(jnp.float32)
    mean = jnp.mean(z, axis=-1, keepdims=True)
    var = jnp.mean((z - mean) ** 2, axis=-1, keepdims=True)
    return ((z - mean) / jnp.sqrt(var + eps)) * gamma + beta


if __name__ == "__main__":
    # Module config: normalized_shape = hidden = 32, dropout = 0.1
    batch, seq, hidden = 2, 8, 32
    dropout_rate = 0.1

    key = jax.random.PRNGKey(0)
    kx, ky, kd = jax.random.split(key, 3)
    X = jax.random.normal(kx, (batch, seq, hidden), dtype=jnp.float32)
    Y = jax.random.normal(ky, (batch, seq, hidden), dtype=jnp.float32)

    # Deterministic LayerNorm params (torch default init: weight=1, bias=0).
    gamma = jnp.ones((hidden,), dtype=jnp.float32)
    beta = jnp.zeros((hidden,), dtype=jnp.float32)

    # Eval-mode forward (dropout is identity at inference, matching torch .eval()).
    out = add_norm(X, Y, gamma, beta, dropout_rate=dropout_rate, training=False)
    out = jax.block_until_ready(out)

    ref = _reference_eval(X, Y, gamma, beta)
    assert out.shape == X.shape
    assert jnp.allclose(out, ref, atol=1e-4, rtol=1e-4), "mismatch vs reference"

    # Training-mode path (fused external dropout mask).  With weight=1 / bias=0,
    # each normalized row must have mean ~0 and (biased) variance ~1.
    out_tr = jax.block_until_ready(
        add_norm(X, Y, gamma, beta, dropout_rate=dropout_rate, training=True,
                 dropout_key=kd))
    assert out_tr.shape == X.shape
    ot = out_tr.reshape(-1, hidden).astype(jnp.float32)
    row_mean = jnp.mean(ot, axis=-1)
    row_var = jnp.mean((ot - row_mean[:, None]) ** 2, axis=-1)
    assert jnp.all(jnp.isfinite(ot))
    assert jnp.allclose(row_mean, 0.0, atol=1e-4)
    assert jnp.allclose(row_var, 1.0, atol=1e-2)

    print("KERNEL_OK")
</pallas_src>

<mosaic_0001>
module attributes {stable_mosaic.version = 11 : i64} {
  func.func @kernel(%arg0: i32, %arg1: memref<4x128xf32, #tpu.memory_space<vmem>>, %arg2: memref<4x128xf32, #tpu.memory_space<vmem>>, %arg3: memref<1x128xf32, #tpu.memory_space<vmem>>, %arg4: memref<1x128xf32, #tpu.memory_space<vmem>>, %arg5: memref<128x128xf32, #tpu.memory_space<vmem>>, %arg6: memref<4x128xf32, #tpu.memory_space<vmem>>) attributes {dimension_semantics = [#tpu.dimension_semantics<parallel>], iteration_bounds = array<i64: 1>, scalar_prefetch = 0 : i64, scratch_operands = 0 : i64, tpu.core_type = #tpu.core_type<tc>, window_params = [{transform_indices = @transform_0, window_bounds = array<i64: 4, 128>}, {transform_indices = @transform_1, window_bounds = array<i64: 4, 128>}, {pipeline_mode = #tpu.pipeline_mode<synchronous>, transform_indices = @transform_2, window_bounds = array<i64: 1, 128>}, {pipeline_mode = #tpu.pipeline_mode<synchronous>, transform_indices = @transform_3, window_bounds = array<i64: 1, 128>}, {pipeline_mode = #tpu.pipeline_mode<synchronous>, transform_indices = @transform_4, window_bounds = array<i64: 128, 128>}, {transform_indices = @transform_5, window_bounds = array<i64: 4, 128>}]} {
    %c0 = arith.constant 0 : index
    %c0_0 = arith.constant 0 : index
    %0 = vector.load %arg2[%c0, %c0_0] : memref<4x128xf32, #tpu.memory_space<vmem>>, vector<4x128xf32>
    %c0_1 = arith.constant 0 : index
    %c0_2 = arith.constant 0 : index
    %1 = vector.load %arg1[%c0_1, %c0_2] : memref<4x128xf32, #tpu.memory_space<vmem>>, vector<4x128xf32>
    %2 = arith.addf %1, %0 : vector<4x128xf32>
    %c0_3 = arith.constant 0 : index
    %c0_4 = arith.constant 0 : index
    %3 = vector.load %arg3[%c0_3, %c0_4] : memref<1x128xf32, #tpu.memory_space<vmem>>, vector<1x128xf32>
    %c0_5 = arith.constant 0 : index
    %c0_6 = arith.constant 0 : index
    %4 = vector.load %arg4[%c0_5, %c0_6] : memref<1x128xf32, #tpu.memory_space<vmem>>, vector<1x128xf32>
    %c0_7 = arith.constant 0 : index
    %c0_8 = arith.constant 0 : index
    %5 = vector.load %arg5[%c0_7, %c0_8] : memref<128x128xf32, #tpu.memory_space<vmem>>, vector<128x128xf32>
    %cst = arith.constant dense<0.000000e+00> : vector<4x128xf32>
    %6 = tpu.matmul %2, %5, %cst {dimension_numbers = #tpu.dot_dimension_numbers<[1], [0], [0], [1], [0, 0, 1, 1], [], []>, precision = #tpu.contract_precision<fp32>} : vector<4x128xf32>, vector<128x128xf32>, vector<4x128xf32> -> vector<4x128xf32>
    %cst_9 = arith.constant 3.125000e-02 : f32
    %7 = vector.broadcast %cst_9 : f32 to vector<4x128xf32>
    %8 = arith.mulf %6, %7 : vector<4x128xf32>
    %9 = arith.subf %2, %8 : vector<4x128xf32>
    %10 = arith.mulf %9, %9 : vector<4x128xf32>
    %cst_10 = arith.constant dense<0.000000e+00> : vector<4x128xf32>
    %11 = tpu.matmul %10, %5, %cst_10 {dimension_numbers = #tpu.dot_dimension_numbers<[1], [0], [0], [1], [0, 0, 1, 1], [], []>, precision = #tpu.contract_precision<fp32>} : vector<4x128xf32>, vector<128x128xf32>, vector<4x128xf32> -> vector<4x128xf32>
    %cst_11 = arith.constant 3.125000e-02 : f32
    %12 = vector.broadcast %cst_11 : f32 to vector<4x128xf32>
    %13 = arith.mulf %11, %12 : vector<4x128xf32>
    %cst_12 = arith.constant 9.99999974E-6 : f32
    %14 = vector.broadcast %cst_12 : f32 to vector<4x128xf32>
    %15 = arith.addf %13, %14 : vector<4x128xf32>
    %16 = math.rsqrt %15 : vector<4x128xf32>
    %17 = arith.mulf %9, %16 : vector<4x128xf32>
    %18 = vector.broadcast %3 : vector<1x128xf32> to vector<4x128xf32>
    %19 = arith.mulf %17, %18 : vector<4x128xf32>
    %20 = vector.broadcast %4 : vector<1x128xf32> to vector<4x128xf32>
    %21 = arith.addf %19, %20 : vector<4x128xf32>
    %c0_13 = arith.constant 0 : index
    %c0_14 = arith.constant 0 : index
    %22 = vector.load %arg6[%c0_13, %c0_14] : memref<4x128xf32, #tpu.memory_space<vmem>>, vector<4x128xf32>
    tpu.vector_store %arg6[%c0_13, %c0_14], %21 {strides = array<i32>} : memref<4x128xf32, #tpu.memory_space<vmem>>, vector<4x128xf32>,
    return
  }
  func.func @transform_0(%arg0: i32) -> (i32, i32) {
    %c0_i32 = arith.constant 0 : i32
    %c0_i32_0 = arith.constant 0 : i32
    return %arg0, %c0_i32 : i32, i32
  }
  func.func @transform_1(%arg0: i32) -> (i32, i32) {
    %c0_i32 = arith.constant 0 : i32
    %c0_i32_0 = arith.constant 0 : i32
    return %arg0, %c0_i32 : i32, i32
  }
  func.func @transform_2(%arg0: i32) -> (i32, i32) {
    %c0_i32 = arith.constant 0 : i32
    %c0_i32_0 = arith.constant 0 : i32
    %c0_i32_1 = arith.constant 0 : i32
    return %c0_i32, %c0_i32_0 : i32, i32
  }
  func.func @transform_3(%arg0: i32) -> (i32, i32) {
    %c0_i32 = arith.constant 0 : i32
    %c0_i32_0 = arith.constant 0 : i32
    %c0_i32_1 = arith.constant 0 : i32
    return %c0_i32, %c0_i32_0 : i32, i32
  }
  func.func @transform_4(%arg0: i32) -> (i32, i32) {
    %c0_i32 = arith.constant 0 : i32
    %c0_i32_0 = arith.constant 0 : i32
    %c0_i32_1 = arith.constant 0 : i32
    return %c0_i32, %c0_i32_0 : i32, i32
  }
  func.func @transform_5(%arg0: i32) -> (i32, i32) {
    %c0_i32 = arith.constant 0 : i32
    %c0_i32_0 = arith.constant 0 : i32
    return %arg0, %c0_i32 : i32, i32
  }
}

</mosaic_0001>

<llo_original>
// kernel: tpu_custom_call.1
$region0: #{tpu_custom_call.1}
  #allocation0 [shape = 'u32[]', space=smem, size = 0x4, offset = 0x4, fixed_abs, tag = 'smem constant byte address 0x4 - core index']
  #allocation1 [shape = 'u32[72,128]{1,0:T(1,128)}', space=vmem, size = 0x9000, scoped, tag = 'internal scratch']
  %s0 = inlined_call_operand.hbm [shape: f32[4,128], index: 0, kind: input, shape index: {}]
  %s1 = inlined_call_operand.hbm [shape: f32[4,128], index: 1, kind: input, shape index: {}]
  %s2 = inlined_call_operand.vmem [shape: f32[1,128], index: 2, kind: input, shape index: {}]
  %s3 = inlined_call_operand.vmem [shape: f32[1,128], index: 3, kind: input, shape index: {}]
  %s4 = inlined_call_operand.hbm [shape: f32[128,128], index: 4, kind: input, shape index: {}]
  %s5 = inlined_call_operand.hbm [shape: f32[4,128], index: 5, kind: output, shape index: {}]
  %s6 = sld [smem:[#allocation0]]
  $region42: #{tpu_custom_call.1} parent=0
    _
  %s8 = ssub.s32 1, %s6
  %s9 = scalar_select 0, %s8, %s6
  $region1: #{tpu_custom_call.1} parent=0
    #allocation2 [shape = 'u8[2048]{0}', space=vmem, size = 0x800, scoped, tag = 'input window, operand 0, single buffered']
    #allocation3 [shape = 's32[1]{0}', space=sflag, size = 0x4, scoped, tag = 'scoped memory for tpu_custom_call.1']
    #allocation4 [shape = 's32[1]{0}', space=sflag, size = 0x4, scoped, tag = 'scoped memory for tpu_custom_call.1']
    #allocation5 [shape = 'u8[2048]{0}', space=vmem, size = 0x800, scoped, tag = 'input window, operand 1, single buffered']
    #allocation6 [shape = 's32[1]{0}', space=sflag, size = 0x4, scoped, tag = 'scoped memory for tpu_custom_call.1']
    #allocation7 [shape = 'u8[65536]{0}', space=vmem, size = 0x10000, scoped, tag = 'input window, operand 4, single buffered']
    #allocation8 [shape = 'u8[2048]{0}', space=vmem, size = 0x800, scoped, tag = 'output window, operand 0, single buffered']
    %10 = vsyncpa [#allocation3], 0
    %11 = vsyncpa [#allocation6], 0
    %12 = vsyncpa [#allocation4], 0
    // Predicated region
    $region2: #{tpu_custom_call.1} parent=1 // pred_check
      _
    $region3: #{tpu_custom_call.1} parent=1 // pred_check_branch
      %14 = sbr.rel (0) target = $region5
    $region4: #{tpu_custom_call.1} parent=1 // pred_region
      %16 = vsyncadd [#allocation3], 0
      %s18 = sshll.u32 %s0, 4
      %s19 = int_to_ptr.hbm [resolvable:$true] %s18
      %s20 = sshll.u32 [#allocation2], 4
      %s21 = int_to_ptr.vmem [resolvable:$true] %s20
      %23 = dma.hbm_to_vmem [thread:$0]  %s19, 64, %s21, [#allocation3]
    $region5: #{tpu_custom_call.1} parent=1 // pred_fallthru
      _
    // Predicated region
    $region6: #{tpu_custom_call.1} parent=1 // pred_check
      _
    $region7: #{tpu_custom_call.1} parent=1 // pred_check_branch
      %25 = sbr.rel (0) target = $region9
    $region8: #{tpu_custom_call.1} parent=1 // pred_region
      %27 = vsyncadd [#allocation6], 0
      %s29 = sshll.u32 %s1, 4
      %s30 = int_to_ptr.hbm [resolvable:$true] %s29
      %s31 = sshll.u32 [#allocation5], 4
      %s32 = int_to_ptr.vmem [resolvable:$true] %s31
      %34 = dma.hbm_to_vmem [thread:$0]  %s30, 64, %s32, [#allocation6]
    $region9: #{tpu_custom_call.1} parent=1 // pred_fallthru
      _
    // Predicated region
    $region10: #{tpu_custom_call.1} parent=1 // pred_check
      _
    $region11: #{tpu_custom_call.1} parent=1 // pred_check_branch
      %36 = sbr.rel (0) target = $region13
    $region12: #{tpu_custom_call.1} parent=1 // pred_region
      _
    $region13: #{tpu_custom_call.1} parent=1 // pred_fallthru
      _
    // Predicated region
    $region14: #{tpu_custom_call.1} parent=1 // pred_check
      _
    $region15: #{tpu_custom_call.1} parent=1 // pred_check_branch
      %38 = sbr.rel (0) target = $region17
    $region16: #{tpu_custom_call.1} parent=1 // pred_region
      _
    $region17: #{tpu_custom_call.1} parent=1 // pred_fallthru
      _
    // Predicated region
    $region18: #{tpu_custom_call.1} parent=1 // pred_check
      _
    $region19: #{tpu_custom_call.1} parent=1 // pred_check_branch
      %40 = sbr.rel (0) target = $region21
    $region20: #{tpu_custom_call.1} parent=1 // pred_region
      %42 = vsyncadd [#allocation6], 0
      %s43 = sshll.u32 %s4, 4
      %s44 = int_to_ptr.hbm [resolvable:$true] %s43
      %s45 = sshll.u32 [#allocation7], 4
      %s46 = int_to_ptr.vmem [resolvable:$true] %s45
      %51 = dma.hbm_to_vmem [thread:$0]  %s44, 2048, %s46, [#allocation6], 128, 128, 8
    $region21: #{tpu_custom_call.1} parent=1 // pred_fallthru
      _
    // Predicated region
    $region22: #{tpu_custom_call.1} parent=1 // pred_check
      _
    $region23: #{tpu_custom_call.1} parent=1 // pred_check_branch
      %53 = sbr.rel (0) target = $region25
    $region24: #{tpu_custom_call.1} parent=1 // pred_region
      %55 = dma.done [#allocation3], 64
    $region25: #{tpu_custom_call.1} parent=1 // pred_fallthru
      _
    // Predicated region
    $region26: #{tpu_custom_call.1} parent=1 // pred_check
      _
    $region27: #{tpu_custom_call.1} parent=1 // pred_check_branch
      %57 = sbr.rel (0) target = $region29
    $region28: #{tpu_custom_call.1} parent=1 // pred_region
      %59 = dma.done [#allocation6], 64
    $region29: #{tpu_custom_call.1} parent=1 // pred_fallthru
      _
    // Predicated region
    $region30: #{tpu_custom_call.1} parent=1 // pred_check
      _
    $region31: #{tpu_custom_call.1} parent=1 // pred_check_branch
      %61 = sbr.rel (0) target = $region33
    $region32: #{tpu_custom_call.1} parent=1 // pred_region
      %63 = dma.done [#allocation6], 2048
    $region33: #{tpu_custom_call.1} parent=1 // pred_fallthru
      _
    %v64 = vld [vmem:[#allocation5] sm:$0xf]
    %v65 = vld [vmem:[#allocation2] sm:$0xf]
    %v66 = vadd.f32 %v65, %v64
    %v67 = vld [vmem:[%s2] sm:$0x1]
    %v68 = vld [vmem:[%s3] sm:$0x1]
    %v69 = vld [vmem:[#allocation7] sm:$0xff]
    %v70 = vld [vmem:[#allocation7 + $0x8] sm:$0xff]
    %v71 = vld [vmem:[#allocation7 + $0x10] sm:$0xff]
    %v72 = vld [vmem:[#allocation7 + $0x18] sm:$0xff]
    %v73 = vld [vmem:[#allocation7 + $0x20] sm:$0xff]
    %v74 = vld [vmem:[#allocation7 + $0x28] sm:$0xff]
    %v75 = vld [vmem:[#allocation7 + $0x30] sm:$0xff]
    %v76 = vld [vmem:[#allocation7 + $0x38] sm:$0xff]
    %v77 = vld [vmem:[#allocation7 + $0x40] sm:$0xff]
    %v78 = vld [vmem:[#allocation7 + $0x48] sm:$0xff]
    %v79 = vld [vmem:[#allocation7 + $0x50] sm:$0xff]
    %v80 = vld [vmem:[#allocation7 + $0x58] sm:$0xff]
    %v81 = vld [vmem:[#allocation7 + $0x60] sm:$0xff]
    %v82 = vld [vmem:[#allocation7 + $0x68] sm:$0xff]
    %v83 = vld [vmem:[#allocation7 + $0x70] sm:$0xff]
    %v84 = vld [vmem:[#allocation7 + $0x78] sm:$0xff]
    %v85 = vand.u32 %v84, 4294901760
    %86 = vmatpush.msra.mxu0 %v85
    %v87 = vand.u32 %v83, 4294901760
    %88 = vmatpush.msra.mxu0 %v87
    %v89 = vand.u32 %v82, 4294901760
    %90 = vmatpush.msra.mxu0 %v89
    %v91 = vand.u32 %v81, 4294901760
    %92 = vmatpush.msra.mxu0 %v91
    %v93 = vand.u32 %v80, 4294901760
    %94 = vmatpush.msra.mxu0 %v93
    %v95 = vand.u32 %v79, 4294901760
    %96 = vmatpush.msra.mxu0 %v95
    %v97 = vand.u32 %v78, 4294901760
    %98 = vmatpush.msra.mxu0 %v97
    %v99 = vand.u32 %v77, 4294901760
    %100 = vmatpush.msra.mxu0 %v99
    %v101 = vand.u32 %v76, 4294901760
    %102 = vmatpush.msra.mxu0 %v101
    %v103 = vand.u32 %v75, 4294901760
    %104 = vmatpush.msra.mxu0 %v103
    %v105 = vand.u32 %v74, 4294901760
    %106 = vmatpush.msra.mxu0 %v105
    %v107 = vand.u32 %v73, 4294901760
    %108 = vmatpush.msra.mxu0 %v107
    %v109 = vand.u32 %v72, 4294901760
    %110 = vmatpush.msra.mxu0 %v109
    %v111 = vand.u32 %v71, 4294901760
    %112 = vmatpush.msra.mxu0 %v111
    %v113 = vand.u32 %v70, 4294901760
    %114 = vmatpush.msra.mxu0 %v113
    %v115 = vand.u32 %v69, 4294901760
    %116 = vmatpush.msra.mxu0 %v115
    %v117 = vand.u32 %v66, 4294901760
    %v118 = vsub.f32 %v66, %v117
    %v119 = vand.u32 %v118, 4294901760
    %v120 = vsub.f32 %v118, %v119
    %v121 = vand.u32 %v120, 4294901760
    %122 = vmatmul.f32.gmra.mxu0 %v121
    %v123 = vpop.f32.mrf.mxu0
    %v124 = vadd.f32 0.0, %v123
    %125 = vdwg.mxu0
    %v126 = vand.u32 %v84, 4294901760
    %v127 = vsub.f32 %v84, %v126
    %v128 = vand.u32 %v127, 4294901760
    %v129 = vsub.f32 %v127, %v128
    %v130 = vand.u32 %v129, 4294901760
    %131 = vmatpush.msra.mxu0 %v130
    %v132 = vand.u32 %v83, 4294901760
    %v133 = vsub.f32 %v83, %v132
    %v134 = vand.u32 %v133, 4294901760
    %v135 = vsub.f32 %v133, %v134
    %v136 = vand.u32 %v135, 4294901760
    %137 = vmatpush.msra.mxu0 %v136
    %v138 = vand.u32 %v82, 4294901760
    %v139 = vsub.f32 %v82, %v138
    %v140 = vand.u32 %v139, 4294901760
    %v141 = vsub.f32 %v139, %v140
    %v142 = vand.u32 %v141, 4294901760
    %143 = vmatpush.msra.mxu0 %v142
    %v144 = vand.u32 %v81, 4294901760
    %v145 = vsub.f32 %v81, %v144
    %v146 = vand.u32 %v145, 4294901760
    %v147 = vsub.f32 %v145, %v146
    %v148 = vand.u32 %v147, 4294901760
    %149 = vmatpush.msra.mxu0 %v148
    %v150 = vand.u32 %v80, 4294901760
    %v151 = vsub.f32 %v80, %v150
    %v152 = vand.u32 %v151, 4294901760
    %v153 = vsub.f32 %v151, %v152
    %v154 = vand.u32 %v153, 4294901760
    %155 = vmatpush.msra.mxu0 %v154
    %v156 = vand.u32 %v79, 4294901760
    %v157 = vsub.f32 %v79, %v156
    %v158 = vand.u32 %v157, 4294901760
    %v159 = vsub.f32 %v157, %v158
    %v160 = vand.u32 %v159, 4294901760
    %161 = vmatpush.msra.mxu0 %v160
    %v162 = vand.u32 %v78, 4294901760
    %v163 = vsub.f32 %v78, %v162
    %v164 = vand.u32 %v163, 4294901760
    %v165 = vsub.f32 %v163, %v164
    %v166 = vand.u32 %v165, 4294901760
    %167 = vmatpush.msra.mxu0 %v166
    %v168 = vand.u32 %v77, 4294901760
    %v169 = vsub.f32 %v77, %v168
    %v170 = vand.u32 %v169, 4294901760
    %v171 = vsub.f32 %v169, %v170
    %v172 = vand.u32 %v171, 4294901760
    %173 = vmatpush.msra.mxu0 %v172
    %v174 = vand.u32 %v76, 4294901760
    %v175 = vsub.f32 %v76, %v174
    %v176 = vand.u32 %v175, 4294901760
    %v177 = vsub.f32 %v175, %v176
    %v178 = vand.u32 %v177, 4294901760
    %179 = vmatpush.msra.mxu0 %v178
    %v180 = vand.u32 %v75, 4294901760
    %v181 = vsub.f32 %v75, %v180
    %v182 = vand.u32 %v181, 4294901760
    %v183 = vsub.f32 %v181, %v182
    %v184 = vand.u32 %v183, 4294901760
    %185 = vmatpush.msra.mxu0 %v184
    %v186 = vand.u32 %v74, 4294901760
    %v187 = vsub.f32 %v74, %v186
    %v188 = vand.u32 %v187, 4294901760
    %v189 = vsub.f32 %v187, %v188
    %v190 = vand.u32 %v189, 4294901760
    %191 = vmatpush.msra.mxu0 %v190
    %v192 = vand.u32 %v73, 4294901760
    %v193 = vsub.f32 %v73, %v192
    %v194 = vand.u32 %v193, 4294901760
    %v195 = vsub.f32 %v193, %v194
    %v196 = vand.u32 %v195, 4294901760
    %197 = vmatpush.msra.mxu0 %v196
    %v198 = vand.u32 %v72, 4294901760
    %v199 = vsub.f32 %v72, %v198
    %v200 = vand.u32 %v199, 4294901760
    %v201 = vsub.f32 %v199, %v200
    %v202 = vand.u32 %v201, 4294901760
    %203 = vmatpush.msra.mxu0 %v202
    %v204 = vand.u32 %v71, 4294901760
    %v205 = vsub.f32 %v71, %v204
    %v206 = vand.u32 %v205, 4294901760
    %v207 = vsub.f32 %v205, %v206
    %v208 = vand.u32 %v207, 4294901760
    %209 = vmatpush.msra.mxu0 %v208
    %v210 = vand.u32 %v70, 4294901760
    %v211 = vsub.f32 %v70, %v210
    %v212 = vand.u32 %v211, 4294901760
    %v213 = vsub.f32 %v211, %v212
    %v214 = vand.u32 %v213, 4294901760
    %215 = vmatpush.msra.mxu0 %v214
    %v216 = vand.u32 %v69, 4294901760
    %v217 = vsub.f32 %v69, %v216
    %v218 = vand.u32 %v217, 4294901760
    %v219 = vsub.f32 %v217, %v218
    %v220 = vand.u32 %v219, 4294901760
    %221 = vmatpush.msra.mxu0 %v220
    %v222 = vand.u32 %v66, 4294901760
    %223 = vmatmul.f32.gmra.mxu0 %v222
    %v224 = vpop.f32.mrf.mxu0
    %v225 = vadd.f32 %v124, %v224
    %226 = vdwg.mxu0
    %v227 = vand.u32 %v84, 4294901760
    %v228 = vsub.f32 %v84, %v227
    %229 = vmatpush.msra.mxu0 %v228
    %v230 = vand.u32 %v83, 4294901760
    %v231 = vsub.f32 %v83, %v230
    %232 = vmatpush.msra.mxu0 %v231
    %v233 = vand.u32 %v82, 4294901760
    %v234 = vsub.f32 %v82, %v233
    %235 = vmatpush.msra.mxu0 %v234
    %v236 = vand.u32 %v81, 4294901760
    %v237 = vsub.f32 %v81, %v236
    %238 = vmatpush.msra.mxu0 %v237
    %v239 = vand.u32 %v80, 4294901760
    %v240 = vsub.f32 %v80, %v239
    %241 = vmatpush.msra.mxu0 %v240
    %v242 = vand.u32 %v79, 4294901760
    %v243 = vsub.f32 %v79, %v242
    %244 = vmatpush.msra.mxu0 %v243
    %v245 = vand.u32 %v78, 4294901760
    %v246 = vsub.f32 %v78, %v245
    %247 = vmatpush.msra.mxu0 %v246
    %v248 = vand.u32 %v77, 4294901760
    %v249 = vsub.f32 %v77, %v248
    %250 = vmatpush.msra.mxu0 %v249
    %v251 = vand.u32 %v76, 4294901760
    %v252 = vsub.f32 %v76, %v251
    %253 = vmatpush.msra.mxu0 %v252
    %v254 = vand.u32 %v75, 4294901760
    %v255 = vsub.f32 %v75, %v254
    %256 = vmatpush.msra.mxu0 %v255
    %v257 = vand.u32 %v74, 4294901760
    %v258 = vsub.f32 %v74, %v257
    %259 = vmatpush.msra.mxu0 %v258
    %v260 = vand.u32 %v73, 4294901760
    %v261 = vsub.f32 %v73, %v260
    %262 = vmatpush.msra.mxu0 %v261
    %v263 = vand.u32 %v72, 4294901760
    %v264 = vsub.f32 %v72, %v263
    %265 = vmatpush.msra.mxu0 %v264
    %v266 = vand.u32 %v71, 4294901760
    %v267 = vsub.f32 %v71, %v266
    %268 = vmatpush.msra.mxu0 %v267
    %v269 = vand.u32 %v70, 4294901760
    %v270 = vsub.f32 %v70, %v269
    %271 = vmatpush.msra.mxu0 %v270
    %v272 = vand.u32 %v69, 4294901760
    %v273 = vsub.f32 %v69, %v272
    %274 = vmatpush.msra.mxu0 %v273
    %v275 = vand.u32 %v66, 4294901760
    %v276 = vsub.f32 %v66, %v275
    %277 = vmatmul.f32.gmra.mxu0 %v276
    %v278 = vpop.f32.mrf.mxu0
    %v279 = vadd.f32 %v225, %v278
    %280 = vdwg.mxu0
    %v281 = vand.u32 %v84, 4294901760
    %282 = vmatpush.msra.mxu0 %v281
    %v283 = vand.u32 %v83, 4294901760
    %284 = vmatpush.msra.mxu0 %v283
    %v285 = vand.u32 %v82, 4294901760
    %286 = vmatpush.msra.mxu0 %v285
    %v287 = vand.u32 %v81, 4294901760
    %288 = vmatpush.msra.mxu0 %v287
    %v289 = vand.u32 %v80, 4294901760
    %290 = vmatpush.msra.mxu0 %v289
    %v291 = vand.u32 %v79, 4294901760
    %292 = vmatpush.msra.mxu0 %v291
    %v293 = vand.u32 %v78, 4294901760
    %294 = vmatpush.msra.mxu0 %v293
    %v295 = vand.u32 %v77, 4294901760
    %296 = vmatpush.msra.mxu0 %v295
    %v297 = vand.u32 %v76, 4294901760
    %298 = vmatpush.msra.mxu0 %v297
    %v299 = vand.u32 %v75, 4294901760
    %300 = vmatpush.msra.mxu0 %v299
    %v301 = vand.u32 %v74, 4294901760
    %302 = vmatpush.msra.mxu0 %v301
    %v303 = vand.u32 %v73, 4294901760
    %304 = vmatpush.msra.mxu0 %v303
    %v305 = vand.u32 %v72, 4294901760
    %306 = vmatpush.msra.mxu0 %v305
    %v307 = vand.u32 %v71, 4294901760
    %308 = vmatpush.msra.mxu0 %v307
    %v309 = vand.u32 %v70, 4294901760
    %310 = vmatpush.msra.mxu0 %v309
    %v311 = vand.u32 %v69, 4294901760
    %312 = vmatpush.msra.mxu0 %v311
    %v313 = vand.u32 %v66, 4294901760
    %v314 = vsub.f32 %v66, %v313
    %v315 = vand.u32 %v314, 4294901760
    %316 = vmatmul.f32.gmra.mxu0 %v315
    %v317 = vpop.f32.mrf.mxu0
    %v318 = vadd.f32 %v279, %v317
    %319 = vdwg.mxu0
    %v320 = vand.u32 %v84, 4294901760
    %v321 = vsub.f32 %v84, %v320
    %v322 = vand.u32 %v321, 4294901760
    %323 = vmatpush.msra.mxu0 %v322
    %v324 = vand.u32 %v83, 4294901760
    %v325 = vsub.f32 %v83, %v324
    %v326 = vand.u32 %v325, 4294901760
    %327 = vmatpush.msra.mxu0 %v326
    %v328 = vand.u32 %v82, 4294901760
    %v329 = vsub.f32 %v82, %v328
    %v330 = vand.u32 %v329, 4294901760
    %331 = vmatpush.msra.mxu0 %v330
    %v332 = vand.u32 %v81, 4294901760
    %v333 = vsub.f32 %v81, %v332
    %v334 = vand.u32 %v333, 4294901760
    %335 = vmatpush.msra.mxu0 %v334
    %v336 = vand.u32 %v80, 4294901760
    %v337 = vsub.f32 %v80, %v336
    %v338 = vand.u32 %v337, 4294901760
    %339 = vmatpush.msra.mxu0 %v338
    %v340 = vand.u32 %v79, 4294901760
    %v341 = vsub.f32 %v79, %v340
    %v342 = vand.u32 %v341, 4294901760
    %343 = vmatpush.msra.mxu0 %v342
    %v344 = vand.u32 %v78, 4294901760
    %v345 = vsub.f32 %v78, %v344
    %v346 = vand.u32 %v345, 4294901760
    %347 = vmatpush.msra.mxu0 %v346
    %v348 = vand.u32 %v77, 4294901760
    %v349 = vsub.f32 %v77, %v348
    %v350 = vand.u32 %v349, 4294901760
    %351 = vmatpush.msra.mxu0 %v350
    %v352 = vand.u32 %v76, 4294901760
    %v353 = vsub.f32 %v76, %v352
    %v354 = vand.u32 %v353, 4294901760
    %355 = vmatpush.msra.mxu0 %v354
    %v356 = vand.u32 %v75, 4294901760
    %v357 = vsub.f32 %v75, %v356
    %v358 = vand.u32 %v357, 4294901760
    %359 = vmatpush.msra.mxu0 %v358
    %v360 = vand.u32 %v74, 4294901760
    %v361 = vsub.f32 %v74, %v360
    %v362 = vand.u32 %v361, 4294901760
    %363 = vmatpush.msra.mxu0 %v362
    %v364 = vand.u32 %v73, 4294901760
    %v365 = vsub.f32 %v73, %v364
    %v366 = vand.u32 %v365, 4294901760
    %367 = vmatpush.msra.mxu0 %v366
    %v368 = vand.u32 %v72, 4294901760
    %v369 = vsub.f32 %v72, %v368
    %v370 = vand.u32 %v369, 4294901760
    %371 = vmatpush.msra.mxu0 %v370
    %v372 = vand.u32 %v71, 4294901760
    %v373 = vsub.f32 %v71, %v372
    %v374 = vand.u32 %v373, 4294901760
    %375 = vmatpush.msra.mxu0 %v374
    %v376 = vand.u32 %v70, 4294901760
    %v377 = vsub.f32 %v70, %v376
    %v378 = vand.u32 %v377, 4294901760
    %379 = vmatpush.msra.mxu0 %v378
    %v380 = vand.u32 %v69, 4294901760
    %v381 = vsub.f32 %v69, %v380
    %v382 = vand.u32 %v381, 4294901760
    %383 = vmatpush.msra.mxu0 %v382
    %v384 = vand.u32 %v66, 4294901760
    %385 = vmatmul.f32.gmra.mxu0 %v384
    %v386 = vpop.f32.mrf.mxu0
    %v387 = vadd.f32 %v318, %v386
    %388 = vdwg.mxu0
    %v389 = vand.u32 %v84, 4294901760
    %390 = vmatpush.msra.mxu0 %v389
    %v391 = vand.u32 %v83, 4294901760
    %392 = vmatpush.msra.mxu0 %v391
    %v393 = vand.u32 %v82, 4294901760
    %394 = vmatpush.msra.mxu0 %v393
    %v395 = vand.u32 %v81, 4294901760
    %396 = vmatpush.msra.mxu0 %v395
    %v397 = vand.u32 %v80, 4294901760
    %398 = vmatpush.msra.mxu0 %v397
    %v399 = vand.u32 %v79, 4294901760
    %400 = vmatpush.msra.mxu0 %v399
    %v401 = vand.u32 %v78, 4294901760
    %402 = vmatpush.msra.mxu0 %v401
    %v403 = vand.u32 %v77, 4294901760
    %404 = vmatpush.msra.mxu0 %v403
    %v405 = vand.u32 %v76, 4294901760
    %406 = vmatpush.msra.mxu0 %v405
    %v407 = vand.u32 %v75, 4294901760
    %408 = vmatpush.msra.mxu0 %v407
    %v409 = vand.u32 %v74, 4294901760
    %410 = vmatpush.msra.mxu0 %v409
    %v411 = vand.u32 %v73, 4294901760
    %412 = vmatpush.msra.mxu0 %v411
    %v413 = vand.u32 %v72, 4294901760
    %414 = vmatpush.msra.mxu0 %v413
    %v415 = vand.u32 %v71, 4294901760
    %416 = vmatpush.msra.mxu0 %v415
    %v417 = vand.u32 %v70, 4294901760
    %418 = vmatpush.msra.mxu0 %v417
    %v419 = vand.u32 %v69, 4294901760
    %420 = vmatpush.msra.mxu0 %v419
    %v421 = vand.u32 %v66, 4294901760
    %422 = vmatmul.f32.gmra.mxu0 %v421
    %v423 = vpop.f32.mrf.mxu0
    %v424 = vadd.f32 %v387, %v423
    %425 = vdwg.mxu0
    %v426 = vmul.f32 %v424, 0.03125
    %v427 = vsub.f32 %v66, %v426
    %v428 = vmul.f32 %v427, %v427
    %v429 = vand.u32 %v84, 4294901760
    %430 = vmatpush.msra.mxu0 %v429
    %v431 = vand.u32 %v83, 4294901760
    %432 = vmatpush.msra.mxu0 %v431
    %v433 = vand.u32 %v82, 4294901760
    %434 = vmatpush.msra.mxu0 %v433
    %v435 = vand.u32 %v81, 4294901760
    %436 = vmatpush.msra.mxu0 %v435
    %v437 = vand.u32 %v80, 4294901760
    %438 = vmatpush.msra.mxu0 %v437
    %v439 = vand.u32 %v79, 4294901760
    %440 = vmatpush.msra.mxu0 %v439
    %v441 = vand.u32 %v78, 4294901760
    %442 = vmatpush.msra.mxu0 %v441
    %v443 = vand.u32 %v77, 4294901760
    %444 = vmatpush.msra.mxu0 %v443
    %v445 = vand.u32 %v76, 4294901760
    %446 = vmatpush.msra.mxu0 %v445
    %v447 = vand.u32 %v75, 4294901760
    %448 = vmatpush.msra.mxu0 %v447
    %v449 = vand.u32 %v74, 4294901760
    %450 = vmatpush.msra.mxu0 %v449
    %v451 = vand.u32 %v73, 4294901760
    %452 = vmatpush.msra.mxu0 %v451
    %v453 = vand.u32 %v72, 4294901760
    %454 = vmatpush.msra.mxu0 %v453
    %v455 = vand.u32 %v71, 4294901760
    %456 = vmatpush.msra.mxu0 %v455
    %v457 = vand.u32 %v70, 4294901760
    %458 = vmatpush.msra.mxu0 %v457
    %v459 = vand.u32 %v69, 4294901760
    %460 = vmatpush.msra.mxu0 %v459
    %v461 = vand.u32 %v428, 4294901760
    %v462 = vsub.f32 %v428, %v461
    %v463 = vand.u32 %v462, 4294901760
    %v464 = vsub.f32 %v462, %v463
    %v465 = vand.u32 %v464, 4294901760
    %466 = vmatmul.f32.gmra.mxu0 %v465
    %v467 = vpop.f32.mrf.mxu0
    %v468 = vadd.f32 0.0, %v467
    %469 = vdwg.mxu0
    %v470 = vand.u32 %v84, 4294901760
    %v471 = vsub.f32 %v84, %v470
    %v472 = vand.u32 %v471, 4294901760
    %v473 = vsub.f32 %v471, %v472
    %v474 = vand.u32 %v473, 4294901760
    %475 = vmatpush.msra.mxu0 %v474
    %v476 = vand.u32 %v83, 4294901760
    %v477 = vsub.f32 %v83, %v476
    %v478 = vand.u32 %v477, 4294901760
    %v479 = vsub.f32 %v477, %v478
    %v480 = vand.u32 %v479, 4294901760
    %481 = vmatpush.msra.mxu0 %v480
    %v482 = vand.u32 %v82, 4294901760
    %v483 = vsub.f32 %v82, %v482
    %v484 = vand.u32 %v483, 4294901760
    %v485 = vsub.f32 %v483, %v484
    %v486 = vand.u32 %v485, 4294901760
    %487 = vmatpush.msra.mxu0 %v486
    %v488 = vand.u32 %v81, 4294901760
    %v489 = vsub.f32 %v81, %v488
    %v490 = vand.u32 %v489, 4294901760
    %v491 = vsub.f32 %v489, %v490
    %v492 = vand.u32 %v491, 4294901760
    %493 = vmatpush.msra.mxu0 %v492
    %v494 = vand.u32 %v80, 4294901760
    %v495 = vsub.f32 %v80, %v494
    %v496 = vand.u32 %v495, 4294901760
    %v497 = vsub.f32 %v495, %v496
    %v498 = vand.u32 %v497, 4294901760
    %499 = vmatpush.msra.mxu0 %v498
    %v500 = vand.u32 %v79, 4294901760
    %v501 = vsub.f32 %v79, %v500
    %v502 = vand.u32 %v501, 4294901760
    %v503 = vsub.f32 %v501, %v502
    %v504 = vand.u32 %v503, 4294901760
    %505 = vmatpush.msra.mxu0 %v504
    %v506 = vand.u32 %v78, 4294901760
    %v507 = vsub.f32 %v78, %v506
    %v508 = vand.u32 %v507, 4294901760
    %v509 = vsub.f32 %v507, %v508
    %v510 = vand.u32 %v509, 4294901760
    %511 = vmatpush.msra.mxu0 %v510
    %v512 = vand.u32 %v77, 4294901760
    %v513 = vsub.f32 %v77, %v512
    %v514 = vand.u32 %v513, 4294901760
    %v515 = vsub.f32 %v513, %v514
    %v516 = vand.u32 %v515, 4294901760
    %517 = vmatpush.msra.mxu0 %v516
    %v518 = vand.u32 %v76, 4294901760
    %v519 = vsub.f32 %v76, %v518
    %v520 = vand.u32 %v519, 4294901760
    %v521 = vsub.f32 %v519, %v520
    %v522 = vand.u32 %v521, 4294901760
    %523 = vmatpush.msra.mxu0 %v522
    %v524 = vand.u32 %v75, 4294901760
    %v525 = vsub.f32 %v75, %v524
    %v526 = vand.u32 %v525, 4294901760
    %v527 = vsub.f32 %v525, %v526
    %v528 = vand.u32 %v527, 4294901760
    %529 = vmatpush.msra.mxu0 %v528
    %v530 = vand.u32 %v74, 4294901760
    %v531 = vsub.f32 %v74, %v530
    %v532 = vand.u32 %v531, 4294901760
    %v533 = vsub.f32 %v531, %v532
    %v534 = vand.u32 %v533, 4294901760
    %535 = vmatpush.msra.mxu0 %v534
    %v536 = vand.u32 %v73, 4294901760
    %v537 = vsub.f32 %v73, %v536
    %v538 = vand.u32 %v537, 4294901760
    %v539 = vsub.f32 %v537, %v538
    %v540 = vand.u32 %v539, 4294901760
    %541 = vmatpush.msra.mxu0 %v540
    %v542 = vand.u32 %v72, 4294901760
    %v543 = vsub.f32 %v72, %v542
    %v544 = vand.u32 %v543, 4294901760
    %v545 = vsub.f32 %v543, %v544
    %v546 = vand.u32 %v545, 4294901760
    %547 = vmatpush.msra.mxu0 %v546
    %v548 = vand.u32 %v71, 4294901760
    %v549 = vsub.f32 %v71, %v548
    %v550 = vand.u32 %v549, 4294901760
    %v551 = vsub.f32 %v549, %v550
    %v552 = vand.u32 %v551, 4294901760
    %553 = vmatpush.msra.mxu0 %v552
    %v554 = vand.u32 %v70, 4294901760
    %v555 = vsub.f32 %v70, %v554
    %v556 = vand.u32 %v555, 4294901760
    %v557 = vsub.f32 %v555, %v556
    %v558 = vand.u32 %v557, 4294901760
    %559 = vmatpush.msra.mxu0 %v558
    %v560 = vand.u32 %v69, 4294901760
    %v561 = vsub.f32 %v69, %v560
    %v562 = vand.u32 %v561, 4294901760
    %v563 = vsub.f32 %v561, %v562
    %v564 = vand.u32 %v563, 4294901760
    %565 = vmatpush.msra.mxu0 %v564
    %v566 = vand.u32 %v428, 4294901760
    %567 = vmatmul.f32.gmra.mxu0 %v566
    %v568 = vpop.f32.mrf.mxu0
    %v569 = vadd.f32 %v468, %v568
    %570 = vdwg.mxu0
    %v571 = vand.u32 %v84, 4294901760
    %v572 = vsub.f32 %v84, %v571
    %573 = vmatpush.msra.mxu0 %v572
    %v574 = vand.u32 %v83, 4294901760
    %v575 = vsub.f32 %v83, %v574
    %576 = vmatpush.msra.mxu0 %v575
    %v577 = vand.u32 %v82, 4294901760
    %v578 = vsub.f32 %v82, %v577
    %579 = vmatpush.msra.mxu0 %v578
    %v580 = vand.u32 %v81, 4294901760
    %v581 = vsub.f32 %v81, %v580
    %582 = vmatpush.msra.mxu0 %v581
    %v583 = vand.u32 %v80, 4294901760
    %v584 = vsub.f32 %v80, %v583
    %585 = vmatpush.msra.mxu0 %v584
    %v586 = vand.u32 %v79, 4294901760
    %v587 = vsub.f32 %v79, %v586
    %588 = vmatpush.msra.mxu0 %v587
    %v589 = vand.u32 %v78, 4294901760
    %v590 = vsub.f32 %v78, %v589
    %591 = vmatpush.msra.mxu0 %v590
    %v592 = vand.u32 %v77, 4294901760
    %v593 = vsub.f32 %v77, %v592
    %594 = vmatpush.msra.mxu0 %v593
    %v595 = vand.u32 %v76, 4294901760
    %v596 = vsub.f32 %v76, %v595
    %597 = vmatpush.msra.mxu0 %v596
    %v598 = vand.u32 %v75, 4294901760
    %v599 = vsub.f32 %v75, %v598
    %600 = vmatpush.msra.mxu0 %v599
    %v601 = vand.u32 %v74, 4294901760
    %v602 = vsub.f32 %v74, %v601
    %603 = vmatpush.msra.mxu0 %v602
    %v604 = vand.u32 %v73, 4294901760
    %v605 = vsub.f32 %v73, %v604
    %606 = vmatpush.msra.mxu0 %v605
    %v607 = vand.u32 %v72, 4294901760
    %v608 = vsub.f32 %v72, %v607
    %609 = vmatpush.msra.mxu0 %v608
    %v610 = vand.u32 %v71, 4294901760
    %v611 = vsub.f32 %v71, %v610
    %612 = vmatpush.msra.mxu0 %v611
    %v613 = vand.u32 %v70, 4294901760
    %v614 = vsub.f32 %v70, %v613
    %615 = vmatpush.msra.mxu0 %v614
    %v616 = vand.u32 %v69, 4294901760
    %v617 = vsub.f32 %v69, %v616
    %618 = vmatpush.msra.mxu0 %v617
    %v619 = vand.u32 %v428, 4294901760
    %v620 = vsub.f32 %v428, %v619
    %621 = vmatmul.f32.gmra.mxu0 %v620
    %v622 = vpop.f32.mrf.mxu0
    %v623 = vadd.f32 %v569, %v622
    %624 = vdwg.mxu0
    %v625 = vand.u32 %v84, 4294901760
    %626 = vmatpush.msra.mxu0 %v625
    %v627 = vand.u32 %v83, 4294901760
    %628 = vmatpush.msra.mxu0 %v627
    %v629 = vand.u32 %v82, 4294901760
    %630 = vmatpush.msra.mxu0 %v629
    %v631 = vand.u32 %v81, 4294901760
    %632 = vmatpush.msra.mxu0 %v631
    %v633 = vand.u32 %v80, 4294901760
    %634 = vmatpush.msra.mxu0 %v633
    %v635 = vand.u32 %v79, 4294901760
    %636 = vmatpush.msra.mxu0 %v635
    %v637 = vand.u32 %v78, 4294901760
    %638 = vmatpush.msra.mxu0 %v637
    %v639 = vand.u32 %v77, 4294901760
    %640 = vmatpush.msra.mxu0 %v639
    %v641 = vand.u32 %v76, 4294901760
    %642 = vmatpush.msra.mxu0 %v641
    %v643 = vand.u32 %v75, 4294901760
    %644 = vmatpush.msra.mxu0 %v643
    %v645 = vand.u32 %v74, 4294901760
    %646 = vmatpush.msra.mxu0 %v645
    %v647 = vand.u32 %v73, 4294901760
    %648 = vmatpush.msra.mxu0 %v647
    %v649 = vand.u32 %v72, 4294901760
    %650 = vmatpush.msra.mxu0 %v649
    %v651 = vand.u32 %v71, 4294901760
    %652 = vmatpush.msra.mxu0 %v651
    %v653 = vand.u32 %v70, 4294901760
    %654 = vmatpush.msra.mxu0 %v653
    %v655 = vand.u32 %v69, 4294901760
    %656 = vmatpush.msra.mxu0 %v655
    %v657 = vand.u32 %v428, 4294901760
    %v658 = vsub.f32 %v428, %v657
    %v659 = vand.u32 %v658, 4294901760
    %660 = vmatmul.f32.gmra.mxu0 %v659
    %v661 = vpop.f32.mrf.mxu0
    %v662 = vadd.f32 %v623, %v661
    %663 = vdwg.mxu0
    %v664 = vand.u32 %v84, 4294901760
    %v665 = vsub.f32 %v84, %v664
    %v666 = vand.u32 %v665, 4294901760
    %667 = vmatpush.msra.mxu0 %v666
    %v668 = vand.u32 %v83, 4294901760
    %v669 = vsub.f32 %v83, %v668
    %v670 = vand.u32 %v669, 4294901760
    %671 = vmatpush.msra.mxu0 %v670
    %v672 = vand.u32 %v82, 4294901760
    %v673 = vsub.f32 %v82, %v672
    %v674 = vand.u32 %v673, 4294901760
    %675 = vmatpush.msra.mxu0 %v674
    %v676 = vand.u32 %v81, 4294901760
    %v677 = vsub.f32 %v81, %v676
    %v678 = vand.u32 %v677, 4294901760
    %679 = vmatpush.msra.mxu0 %v678
    %v680 = vand.u32 %v80, 4294901760
    %v681 = vsub.f32 %v80, %v680
    %v682 = vand.u32 %v681, 4294901760
    %683 = vmatpush.msra.mxu0 %v682
    %v684 = vand.u32 %v79, 4294901760
    %v685 = vsub.f32 %v79, %v684
    %v686 = vand.u32 %v685, 4294901760
    %687 = vmatpush.msra.mxu0 %v686
    %v688 = vand.u32 %v78, 4294901760
    %v689 = vsub.f32 %v78, %v688
    %v690 = vand.u32 %v689, 4294901760
    %691 = vmatpush.msra.mxu0 %v690
    %v692 = vand.u32 %v77, 4294901760
    %v693 = vsub.f32 %v77, %v692
    %v694 = vand.u32 %v693, 4294901760
    %695 = vmatpush.msra.mxu0 %v694
    %v696 = vand.u32 %v76, 4294901760
    %v697 = vsub.f32 %v76, %v696
    %v698 = vand.u32 %v697, 4294901760
    %699 = vmatpush.msra.mxu0 %v698
    %v700 = vand.u32 %v75, 4294901760
    %v701 = vsub.f32 %v75, %v700
    %v702 = vand.u32 %v701, 4294901760
    %703 = vmatpush.msra.mxu0 %v702
    %v704 = vand.u32 %v74, 4294901760
    %v705 = vsub.f32 %v74, %v704
    %v706 = vand.u32 %v705, 4294901760
    %707 = vmatpush.msra.mxu0 %v706
    %v708 = vand.u32 %v73, 4294901760
    %v709 = vsub.f32 %v73, %v708
    %v710 = vand.u32 %v709, 4294901760
    %711 = vmatpush.msra.mxu0 %v710
    %v712 = vand.u32 %v72, 4294901760
    %v713 = vsub.f32 %v72, %v712
    %v714 = vand.u32 %v713, 4294901760
    %715 = vmatpush.msra.mxu0 %v714
    %v716 = vand.u32 %v71, 4294901760
    %v717 = vsub.f32 %v71, %v716
    %v718 = vand.u32 %v717, 4294901760
    %719 = vmatpush.msra.mxu0 %v718
    %v720 = vand.u32 %v70, 4294901760
    %v721 = vsub.f32 %v70, %v720
    %v722 = vand.u32 %v721, 4294901760
    %723 = vmatpush.msra.mxu0 %v722
    %v724 = vand.u32 %v69, 4294901760
    %v725 = vsub.f32 %v69, %v724
    %v726 = vand.u32 %v725, 4294901760
    %727 = vmatpush.msra.mxu0 %v726
    %v728 = vand.u32 %v428, 4294901760
    %729 = vmatmul.f32.gmra.mxu0 %v728
    %v730 = vpop.f32.mrf.mxu0
    %v731 = vadd.f32 %v662, %v730
    %732 = vdwg.mxu0
    %v733 = vand.u32 %v84, 4294901760
    %734 = vmatpush.msra.mxu0 %v733
    %v735 = vand.u32 %v83, 4294901760
    %736 = vmatpush.msra.mxu0 %v735
    %v737 = vand.u32 %v82, 4294901760
    %738 = vmatpush.msra.mxu0 %v737
    %v739 = vand.u32 %v81, 4294901760
    %740 = vmatpush.msra.mxu0 %v739
    %v741 = vand.u32 %v80, 4294901760
    %742 = vmatpush.msra.mxu0 %v741
    %v743 = vand.u32 %v79, 4294901760
    %744 = vmatpush.msra.mxu0 %v743
    %v745 = vand.u32 %v78, 4294901760
    %746 = vmatpush.msra.mxu0 %v745
    %v747 = vand.u32 %v77, 4294901760
    %748 = vmatpush.msra.mxu0 %v747
    %v749 = vand.u32 %v76, 4294901760
    %750 = vmatpush.msra.mxu0 %v749
    %v751 = vand.u32 %v75, 4294901760
    %752 = vmatpush.msra.mxu0 %v751
    %v753 = vand.u32 %v74, 4294901760
    %754 = vmatpush.msra.mxu0 %v753
    %v755 = vand.u32 %v73, 4294901760
    %756 = vmatpush.msra.mxu0 %v755
    %v757 = vand.u32 %v72, 4294901760
    %758 = vmatpush.msra.mxu0 %v757
    %v759 = vand.u32 %v71, 4294901760
    %760 = vmatpush.msra.mxu0 %v759
    %v761 = vand.u32 %v70, 4294901760
    %762 = vmatpush.msra.mxu0 %v761
    %v763 = vand.u32 %v69, 4294901760
    %764 = vmatpush.msra.mxu0 %v763
    %v765 = vand.u32 %v428, 4294901760
    %766 = vmatmul.f32.gmra.mxu0 %v765
    %v767 = vpop.f32.mrf.mxu0
    %v768 = vadd.f32 %v731, %v767
    %769 = vdwg.mxu0
    %v770 = vmul.f32 %v768, 0.03125
    %v771 = vadd.f32 %v770, 1e-05
    %v772 = vrsqrt.pop %v771
    %v773 = vmul.f32 %v772, %v771
    %v774 = vmul.f32 %v773, %v772
    %v775 = vmul.f32 0.5, %v774
    %v776 = vsub.f32 1.5, %v775
    %v777 = vmul.f32 %v772, %v776
    %vm778 = vweird.f32 %v771
    %vm779 = vweird.f32 %v772
    %vm780 = vmor %vm778, %vm779
    %v781 = vsel %vm780, %v772, %v777
    %v782 = vmul.f32 %v427, %v781
    %v784 = vperm.slane %v67, 0
    %v786 = vmul.f32 %v782, %v784
    %v788 = vperm.slane %v68, 0
    %v790 = vadd.f32 %v786, %v788
    %791 = vst [vmem:[#allocation8] sm:$0xf] %v790
    // Predicated region
    $region34: #{tpu_custom_call.1} parent=1 // pred_check
      _
    $region35: #{tpu_custom_call.1} parent=1 // pred_check_branch
      %793 = sbr.rel (0) target = $region37
    $region36: #{tpu_custom_call.1} parent=1 // pred_region
      %795 = vsyncadd [#allocation4], 0
      %s797 = sshll.u32 [#allocation8], 4
      %s798 = int_to_ptr.vmem [resolvable:$true] %s797
      %s799 = sshll.u32 %s5, 4
      %s800 = int_to_ptr.hbm [resolvable:$true] %s799
      %802 = dma.vmem_to_hbm [thread:$0]  %s798, 64, %s800, [#allocation4]
    $region37: #{tpu_custom_call.1} parent=1 // pred_fallthru
      _
    // Predicated region
    $region38: #{tpu_custom_call.1} parent=1 // pred_check
      _
    $region39: #{tpu_custom_call.1} parent=1 // pred_check_branch
      %804 = sbr.rel (0) target = $region41
    $region40: #{tpu_custom_call.1} parent=1 // pred_region
      %806 = dma.done [#allocation4], 64
    $region41: #{tpu_custom_call.1} parent=1 // pred_fallthru
      _
    %807 = vsyncpa [#allocation3], 1
    %808 = vsyncpa [#allocation6], 1
    %809 = vsyncpa [#allocation4], 1

</llo_original>
